<compile_context>
chip_gen: v7x
topology: tpu7x:2x2x1
jax: 0.10.0
libtpu: 0.0.40
codegen_flags: <defaults>
</compile_context>

<pallas_src>
import math

import numpy as np
import jax
import jax.numpy as jnp
from jax.experimental import pallas as pl
from jax.experimental.pallas import tpu as pltpu

# ----------------------------- configuration --------------------------------
B, SEQ = 2, 8
X_DIM = 32          # feature dim of x
CHAIN_EMB = 8       # emb_dim of each NoteClassifier
CHAIN_LEN = 3       # chain_length
NUM_NOTES = 4       # num_notes

# candidate table bookkeeping
NCAND = sum(2 ** min(n, CHAIN_LEN) for n in range(NUM_NOTES))                 # 15
CAND_OFF = [sum(2 ** min(m, CHAIN_LEN) for m in range(n)) for n in range(NUM_NOTES)]

ACT_W = ((X_DIM + NUM_NOTES + 7) // 8) * 8   # 40:  x | uniforms | zero pad
HID_W = NCAND * CHAIN_EMB                    # 120: candidate-expanded hidden width

# weight-slab row offsets (all multiples of 8 -> tile-aligned row slices)
R_W1 = 0                       # rows [0, ACT_W)       : candidate-expanded x-weights
R_OFF = ACT_W                  # row  ACT_W            : per-candidate hidden offsets
R_W2 = R_OFF + 8               # rows [48, 48+HID_W)   : block-diag second-layer weights
R_B2 = R_W2 + HID_W            # row  168              : per-candidate output biases
SLAB_ROWS = R_B2 + 8           # 176

_VMEM = pl.BlockSpec(memory_space=pltpu.MemorySpace.VMEM)


# ----------------------------- fused Pallas kernel ---------------------------
def _chain_classifier_kernel(act_ref, slab_ref, out_ref):
    """Whole ChainClassifier.forward for M rows, fully fused in VMEM."""
    M = act_ref.shape[0]
    NN, CL = NUM_NOTES, CHAIN_LEN

    act = act_ref[...]                                    # (M, ACT_W) = x | u | 0
    w1 = slab_ref[R_W1:R_W1 + ACT_W, :]                   # (ACT_W, HID_W)
    off = slab_ref[R_OFF:R_OFF + 1, :]                    # (1, HID_W)
    w2 = slab_ref[R_W2:R_W2 + HID_W, :]                   # (HID_W, HID_W), cols>=NCAND zero
    b2 = slab_ref[R_B2:R_B2 + 1, :]                       # (1, HID_W)

    # Candidate probability table: sigmoid(relu(x@W1x_n + off_{n,c}) @ w2_n + b2_n)
    # for every (note n, previous-pred pattern c), all in one batched pass.
    # (u / pad columns of `act` hit zero weight rows, so no slicing is needed.)
    h = jnp.maximum(jnp.dot(act, w1, preferred_element_type=jnp.float32) + off, 0.0)
    logits = jnp.dot(h, w2, preferred_element_type=jnp.float32) + b2
    probs = jax.nn.sigmoid(logits)                        # (M, HID_W); cols [0, NCAND) valid

    # Sequential chain: per note, a tiny binary select-tree over the already
    # sampled bits + one compare + one FMA.  No MXU / EUP work on this path.
    preds_b = []                                          # sampled bits (bool (M,1))
    pred_cols = []                                        # sampled bits as f32 columns
    pm = jnp.zeros((M, 1), jnp.float32)
    for n in range(NN):
        k = min(n, CL)
        base = CAND_OFF[n]
        cand = [probs[:, base + c:base + c + 1] for c in range(2 ** k)]
        for i in range(k):                                # bit i <-> pred_{n-1-i}
            b = preds_b[n - 1 - i]
            cand = [jnp.where(b, cand[2 * j + 1], cand[2 * j])
                    for j in range(len(cand) // 2)]
        p_n = cand[0]                                     # (M, 1) note probability
        b_n = act[:, X_DIM + n:X_DIM + n + 1] < p_n       # bernoulli via uniform
        preds_b.append(b_n)
        pred_cols.append(b_n.astype(jnp.float32))
        pm = pm + jnp.where(b_n, p_n, 1.0 - p_n)          # prob_mass accumulation

    # Single lane-dense store: [pred_0 .. pred_{NN-1}, prob_mass].
    out_ref[...] = jnp.concatenate(pred_cols + [pm], axis=1)


# ----------------------------- wrapper ---------------------------------------
@jax.jit
def chain_classifier_forward(slab, x, u):
    """x: (..., X_DIM) float32; u: (..., NUM_NOTES) uniforms in [0,1)."""
    lead = x.shape[:-1]
    M = math.prod(lead)
    x2 = x.reshape(M, X_DIM).astype(jnp.float32)
    u2 = u.reshape(M, NUM_NOTES).astype(jnp.float32)

    act = jnp.zeros((M, ACT_W), jnp.float32)
    act = act.at[:, :X_DIM].set(x2).at[:, X_DIM:X_DIM + NUM_NOTES].set(u2)

    out = pl.pallas_call(
        _chain_classifier_kernel,
        out_shape=jax.ShapeDtypeStruct((M, NUM_NOTES + 1), jnp.float32),
        in_specs=[_VMEM, _VMEM],
        out_specs=_VMEM,
    )(act, slab)

    pred = out[:, :NUM_NOTES].reshape(*lead, NUM_NOTES)
    pm = out[:, NUM_NOTES].reshape(lead)
    return pred, pm


# ----------------------------- weight packing ---------------------------------
def pack_params(p):
    """Pack all weights into one pre-padded f32 slab (one DMA at call time).

    For every note n and every binary pattern c of the previously sampled notes
    inside its chain window, the link-dependent part of note_linear1
    (chain_linear2(relu(chain_linear1(links))) @ W1l_n^T + b1_n) is folded into
    a per-candidate bias offset.  The x-dependent weights are replicated per
    candidate, and the second linear layer becomes block-diagonal, so the kernel
    can evaluate all candidates with two matmuls.
    """
    D, E, NN, CL = X_DIM, CHAIN_EMB, NUM_NOTES, CHAIN_LEN
    cw1 = np.asarray(p["chain_l1"][0], np.float32)
    cb1 = np.asarray(p["chain_l1"][1], np.float32)
    cw2 = np.asarray(p["chain_l2"][0], np.float32)
    cb2 = np.asarray(p["chain_l2"][1], np.float32)

    slab = np.zeros((SLAB_ROWS, HID_W), np.float32)
    j = 0
    for n in range(NN):
        W1 = np.asarray(p["note_w1"][n], np.float32)     # (E, D+CL) torch (out, in)
        b1 = np.asarray(p["note_b1"][n], np.float32)     # (E,)
        w2 = np.asarray(p["note_w2"][n], np.float32)     # (1, E)
        b2 = np.asarray(p["note_b2"][n], np.float32)     # (1,)
        A = W1[:, :D].T                                  # (D, E)  x-part
        Bw = W1[:, D:].T                                 # (CL, E) link-part
        k = min(n, CL)
        for c in range(2 ** k):
            # links_jj = labels[n+jj]: structural zero if n+jj < CL else bit of c
            links = np.array(
                [float((c >> (CL - 1 - jj)) & 1) if (n + jj) >= CL else 0.0
                 for jj in range(CL)], np.float32)
            l = np.maximum(links @ cw1.T + cb1, 0.0) @ cw2.T + cb2   # (CL,)
            cols = slice(j * E, (j + 1) * E)
            slab[R_W1:R_W1 + D, cols] = A
            slab[R_OFF, cols] = l @ Bw + b1
            slab[R_W2 + j * E:R_W2 + (j + 1) * E, j] = w2.reshape(E)
            slab[R_B2, j] = b2[0]
            j += 1
    assert j == NCAND
    return jnp.asarray(slab)


# ----------------------------- pure-JAX reference -----------------------------
def reference_forward(p, x, u):
    """Literal transcription of the torch forward (incl. the zero_prob branch)."""
    NN, CL = NUM_NOTES, CHAIN_LEN
    lead = x.shape[:-1]
    cw1, cb1 = p["chain_l1"]
    cw2, cb2 = p["chain_l2"]

    def chain_l(links):
        h = jax.nn.relu(links @ cw1.T + cb1)
        return h @ cw2.T + cb2

    def note_cls(n, h):
        z = jax.nn.relu(h @ p["note_w1"][n].T + p["note_b1"][n])
        return z @ p["note_w2"][n].T + p["note_b2"][n]

    labels = jnp.zeros(lead + (NN + CL,), jnp.float32)
    allzeros_l = chain_l(labels[..., :CL])
    allzeros_h = jnp.concatenate([x, allzeros_l], axis=-1)
    zero_prob = jax.nn.sigmoid(
        jnp.concatenate([note_cls(n, allzeros_h) for n in range(NN)], axis=-1))

    prob_mass = jnp.zeros(lead, jnp.float32)
    for n in range(NN):
        note_links = labels[..., n:n + CL]
        if bool(jnp.all(note_links == 0)):      # host branch OK here (reference only)
            note_prob = zero_prob[..., n]
        else:
            note_l = chain_l(note_links)
            h = jnp.concatenate([x, note_l], axis=-1)
            note_prob = jax.nn.sigmoid(note_cls(n, h))[..., 0]
        note_pred = (u[..., n] < note_prob).astype(jnp.float32)
        labels = labels.at[..., n + CL].set(note_pred)
        prob_mass = prob_mass + note_prob * note_pred + (1.0 - note_prob) * (1.0 - note_pred)
    return labels[..., CL:], prob_mass


# ----------------------------- parameter init ---------------------------------
def _init_linear(key, out_dim, in_dim):
    kw, kb = jax.random.split(key)
    s = 1.0 / math.sqrt(in_dim)
    w = jax.random.uniform(kw, (out_dim, in_dim), jnp.float32, -s, s)
    b = jax.random.uniform(kb, (out_dim,), jnp.float32, -s, s)
    return w, b


def init_params(key):
    keys = iter(jax.random.split(key, 32))
    nk = lambda: next(keys)
    p = {"chain_l1": _init_linear(nk(), CHAIN_LEN, CHAIN_LEN),
         "chain_l2": _init_linear(nk(), CHAIN_LEN, CHAIN_LEN),
         "note_w1": [], "note_b1": [], "note_w2": [], "note_b2": []}
    for _ in range(NUM_NOTES):
        w1, b1 = _init_linear(nk(), CHAIN_EMB, X_DIM + CHAIN_LEN)
        w2, b2 = _init_linear(nk(), 1, CHAIN_EMB)
        p["note_w1"].append(w1)
        p["note_b1"].append(b1)
        p["note_w2"].append(w2)
        p["note_b2"].append(b2)
    return p


# ----------------------------- main --------------------------------------------
if __name__ == "__main__":
    key = jax.random.PRNGKey(0)
    k_x, k_u = jax.random.split(key)
    x = jax.random.normal(k_x, (B, SEQ, X_DIM), jnp.float32)
    u = jax.random.uniform(k_u, (B, SEQ, NUM_NOTES), jnp.float32)

    params = init_params(jax.random.PRNGKey(42))
    slab = pack_params(params)

    note_pred, prob_mass = chain_classifier_forward(slab, x, u)
    jax.block_until_ready((note_pred, prob_mass))

    assert note_pred.shape == (B, SEQ, NUM_NOTES)
    assert prob_mass.shape == (B, SEQ)

    # correctness check against a pure-JAX transcription of the torch forward
    ref_pred, ref_pm = reference_forward(params, x, u)
    assert bool(jnp.array_equal(note_pred, ref_pred)), "note_pred mismatch vs reference"
    assert bool(jnp.allclose(prob_mass, ref_pm, atol=1e-4, rtol=1e-4)), \
        "prob_mass mismatch vs reference"

    print("KERNEL_OK")
</pallas_src>

<mosaic_0001>
module attributes {stable_mosaic.version = 11 : i64} {
  func.func @_chain_classifier_kernel(%arg0: memref<16x40xf32, #tpu.memory_space<vmem>>, %arg1: memref<176x120xf32, #tpu.memory_space<vmem>>, %arg2: memref<16x5xf32, #tpu.memory_space<vmem>>) attributes {dimension_semantics = [], scalar_prefetch = 0 : i64, scratch_operands = 0 : i64, tpu.core_type = #tpu.core_type<tc>} {
    %c0 = arith.constant 0 : index
    %c0_0 = arith.constant 0 : index
    %0 = vector.load %arg0[%c0, %c0_0] : memref<16x40xf32, #tpu.memory_space<vmem>>, vector<16x40xf32>
    %c0_1 = arith.constant 0 : index
    %c0_2 = arith.constant 0 : index
    %1 = vector.load %arg1[%c0_1, %c0_2] : memref<176x120xf32, #tpu.memory_space<vmem>>, vector<40x120xf32>
    %c40 = arith.constant 40 : index
    %c0_3 = arith.constant 0 : index
    %2 = vector.load %arg1[%c40, %c0_3] : memref<176x120xf32, #tpu.memory_space<vmem>>, vector<1x120xf32>
    %c48 = arith.constant 48 : index
    %c0_4 = arith.constant 0 : index
    %3 = vector.load %arg1[%c48, %c0_4] : memref<176x120xf32, #tpu.memory_space<vmem>>, vector<120x120xf32>
    %c168 = arith.constant 168 : index
    %c0_5 = arith.constant 0 : index
    %4 = vector.load %arg1[%c168, %c0_5] : memref<176x120xf32, #tpu.memory_space<vmem>>, vector<1x120xf32>
    %cst = arith.constant dense<0.000000e+00> : vector<16x120xf32>
    %5 = tpu.matmul %0, %1, %cst {dimension_numbers = #tpu.dot_dimension_numbers<[1], [0], [0], [1], [0, 0, 1, 1], [], []>} : vector<16x40xf32>, vector<40x120xf32>, vector<16x120xf32> -> vector<16x120xf32>
    %6 = vector.broadcast %2 : vector<1x120xf32> to vector<16x120xf32>
    %7 = arith.addf %5, %6 : vector<16x120xf32>
    %cst_6 = arith.constant 0.000000e+00 : f32
    %8 = vector.broadcast %cst_6 : f32 to vector<16x120xf32>
    %9 = arith.maximumf %7, %8 : vector<16x120xf32>
    %cst_7 = arith.constant dense<0.000000e+00> : vector<16x120xf32>
    %10 = tpu.matmul %9, %3, %cst_7 {dimension_numbers = #tpu.dot_dimension_numbers<[1], [0], [0], [1], [0, 0, 1, 1], [], []>} : vector<16x120xf32>, vector<120x120xf32>, vector<16x120xf32> -> vector<16x120xf32>
    %11 = vector.broadcast %4 : vector<1x120xf32> to vector<16x120xf32>
    %12 = arith.addf %10, %11 : vector<16x120xf32>
    %13 = arith.negf %12 : vector<16x120xf32>
    %14 = math.exp %13 : vector<16x120xf32>
    %cst_8 = arith.constant 1.000000e+00 : f32
    %15 = vector.broadcast %cst_8 : f32 to vector<16x120xf32>
    %16 = arith.addf %15, %14 : vector<16x120xf32>
    %17 = arith.divf %15, %16 : vector<16x120xf32>
    %cst_9 = arith.constant 0.000000e+00 : f32
    %18 = vector.broadcast %cst_9 : f32 to vector<16x1xf32>
    %19 = vector.extract_strided_slice %17 {offsets = [0, 0], sizes = [16, 1], strides = [1, 1]} : vector<16x120xf32> to vector<16x1xf32>
    %20 = vector.extract_strided_slice %0 {offsets = [0, 32], sizes = [16, 1], strides = [1, 1]} : vector<16x40xf32> to vector<16x1xf32>
    %21 = arith.cmpf olt, %20, %19 : vector<16x1xf32>
    %22 = arith.extui %21 : vector<16x1xi1> to vector<16x1xi32>
    %23 = arith.sitofp %22 : vector<16x1xi32> to vector<16x1xf32>
    %cst_10 = arith.constant 1.000000e+00 : f32
    %24 = vector.broadcast %cst_10 : f32 to vector<16x1xf32>
    %25 = arith.subf %24, %19 : vector<16x1xf32>
    %26 = arith.select %21, %19, %25 : vector<16x1xi1>, vector<16x1xf32>
    %27 = arith.addf %18, %26 : vector<16x1xf32>
    %28 = vector.extract_strided_slice %17 {offsets = [0, 1], sizes = [16, 1], strides = [1, 1]} : vector<16x120xf32> to vector<16x1xf32>
    %29 = vector.extract_strided_slice %17 {offsets = [0, 2], sizes = [16, 1], strides = [1, 1]} : vector<16x120xf32> to vector<16x1xf32>
    %30 = arith.select %21, %29, %28 : vector<16x1xi1>, vector<16x1xf32>
    %31 = vector.extract_strided_slice %0 {offsets = [0, 33], sizes = [16, 1], strides = [1, 1]} : vector<16x40xf32> to vector<16x1xf32>
    %32 = arith.cmpf olt, %31, %30 : vector<16x1xf32>
    %33 = arith.extui %32 : vector<16x1xi1> to vector<16x1xi32>
    %34 = arith.sitofp %33 : vector<16x1xi32> to vector<16x1xf32>
    %cst_11 = arith.constant 1.000000e+00 : f32
    %35 = vector.broadcast %cst_11 : f32 to vector<16x1xf32>
    %36 = arith.subf %35, %30 : vector<16x1xf32>
    %37 = arith.select %32, %30, %36 : vector<16x1xi1>, vector<16x1xf32>
    %38 = arith.addf %27, %37 : vector<16x1xf32>
    %39 = vector.extract_strided_slice %17 {offsets = [0, 3], sizes = [16, 1], strides = [1, 1]} : vector<16x120xf32> to vector<16x1xf32>
    %40 = vector.extract_strided_slice %17 {offsets = [0, 4], sizes = [16, 1], strides = [1, 1]} : vector<16x120xf32> to vector<16x1xf32>
    %41 = vector.extract_strided_slice %17 {offsets = [0, 5], sizes = [16, 1], strides = [1, 1]} : vector<16x120xf32> to vector<16x1xf32>
    %42 = vector.extract_strided_slice %17 {offsets = [0, 6], sizes = [16, 1], strides = [1, 1]} : vector<16x120xf32> to vector<16x1xf32>
    %43 = arith.select %32, %40, %39 : vector<16x1xi1>, vector<16x1xf32>
    %44 = arith.select %32, %42, %41 : vector<16x1xi1>, vector<16x1xf32>
    %45 = arith.select %21, %44, %43 : vector<16x1xi1>, vector<16x1xf32>
    %46 = vector.extract_strided_slice %0 {offsets = [0, 34], sizes = [16, 1], strides = [1, 1]} : vector<16x40xf32> to vector<16x1xf32>
    %47 = arith.cmpf olt, %46, %45 : vector<16x1xf32>
    %48 = arith.extui %47 : vector<16x1xi1> to vector<16x1xi32>
    %49 = arith.sitofp %48 : vector<16x1xi32> to vector<16x1xf32>
    %cst_12 = arith.constant 1.000000e+00 : f32
    %50 = vector.broadcast %cst_12 : f32 to vector<16x1xf32>
    %51 = arith.subf %50, %45 : vector<16x1xf32>
    %52 = arith.select %47, %45, %51 : vector<16x1xi1>, vector<16x1xf32>
    %53 = arith.addf %38, %52 : vector<16x1xf32>
    %54 = vector.extract_strided_slice %17 {offsets = [0, 7], sizes = [16, 1], strides = [1, 1]} : vector<16x120xf32> to vector<16x1xf32>
    %55 = vector.extract_strided_slice %17 {offsets = [0, 8], sizes = [16, 1], strides = [1, 1]} : vector<16x120xf32> to vector<16x1xf32>
    %56 = vector.extract_strided_slice %17 {offsets = [0, 9], sizes = [16, 1], strides = [1, 1]} : vector<16x120xf32> to vector<16x1xf32>
    %57 = vector.extract_strided_slice %17 {offsets = [0, 10], sizes = [16, 1], strides = [1, 1]} : vector<16x120xf32> to vector<16x1xf32>
    %58 = vector.extract_strided_slice %17 {offsets = [0, 11], sizes = [16, 1], strides = [1, 1]} : vector<16x120xf32> to vector<16x1xf32>
    %59 = vector.extract_strided_slice %17 {offsets = [0, 12], sizes = [16, 1], strides = [1, 1]} : vector<16x120xf32> to vector<16x1xf32>
    %60 = vector.extract_strided_slice %17 {offsets = [0, 13], sizes = [16, 1], strides = [1, 1]} : vector<16x120xf32> to vector<16x1xf32>
    %61 = vector.extract_strided_slice %17 {offsets = [0, 14], sizes = [16, 1], strides = [1, 1]} : vector<16x120xf32> to vector<16x1xf32>
    %62 = arith.select %47, %55, %54 : vector<16x1xi1>, vector<16x1xf32>
    %63 = arith.select %47, %57, %56 : vector<16x1xi1>, vector<16x1xf32>
    %64 = arith.select %47, %59, %58 : vector<16x1xi1>, vector<16x1xf32>
    %65 = arith.select %47, %61, %60 : vector<16x1xi1>, vector<16x1xf32>
    %66 = arith.select %32, %63, %62 : vector<16x1xi1>, vector<16x1xf32>
    %67 = arith.select %32, %65, %64 : vector<16x1xi1>, vector<16x1xf32>
    %68 = arith.select %21, %67, %66 : vector<16x1xi1>, vector<16x1xf32>
    %69 = vector.extract_strided_slice %0 {offsets = [0, 35], sizes = [16, 1], strides = [1, 1]} : vector<16x40xf32> to vector<16x1xf32>
    %70 = arith.cmpf olt, %69, %68 : vector<16x1xf32>
    %71 = arith.extui %70 : vector<16x1xi1> to vector<16x1xi32>
    %72 = arith.sitofp %71 : vector<16x1xi32> to vector<16x1xf32>
    %cst_13 = arith.constant 1.000000e+00 : f32
    %73 = vector.broadcast %cst_13 : f32 to vector<16x1xf32>
    %74 = arith.subf %73, %68 : vector<16x1xf32>
    %75 = arith.select %70, %68, %74 : vector<16x1xi1>, vector<16x1xf32>
    %76 = arith.addf %53, %75 : vector<16x1xf32>
    %77 = tpu.concatenate %23, %34, %49, %72, %76 in 1 : vector<16x1xf32>, vector<16x1xf32>, vector<16x1xf32>, vector<16x1xf32>, vector<16x1xf32> -> vector<16x5xf32>
    %c0_14 = arith.constant 0 : index
    %c0_15 = arith.constant 0 : index
    %78 = vector.load %arg2[%c0_14, %c0_15] : memref<16x5xf32, #tpu.memory_space<vmem>>, vector<16x5xf32>
    tpu.vector_store %arg2[%c0_14, %c0_15], %77 {strides = array<i32>} : memref<16x5xf32, #tpu.memory_space<vmem>>, vector<16x5xf32>,
    return
  }
}

</mosaic_0001>

<llo_original>
// kernel: squeeze.1
$region0: #{squeeze.1}
  %s0 = inlined_call_operand.vmem [shape: f32[16], index: 0, kind: input, shape index: {}]
  %s1 = inlined_call_operand.hbm [shape: f32[2,8], index: 1, kind: output, shape index: {}]
  $region1: #{squeeze.1} parent=0
    #allocation0 [shape = 'u8[1024]{0}', space=vmem, size = 0x400, scoped, tag = 'operand span for operand 1']
    #allocation1 [shape = 's32[1]{0}', space=sflag, size = 0x4, scoped, tag = 'scoped memory for squeeze.1']
    #allocation2 [shape = 'u8[4096]{0}', space=vmem, size = 0x1000, scoped, tag = 'scoped mem for output reshape']
    #allocation3 [shape = 'u8[4096]{0}', space=vmem, size = 0x1000, scoped, tag = 'scoped mem for input reshape']
    %2 = vsyncpa [#allocation1], 0
    %s4 = sshllo.u32 0, 1
    %v5 = vld [vmem:[%s0] sm:%s4]
    %6 = vst [vmem:[#allocation3] sm:%s4] %v5
    %v7 = vld [vmem:[#allocation3] sm:$0x1]
    %vm8 = vcmask 64512
    %9 = vst.msk [vmem:[#allocation2] sm:$0x1] %vm8, %v7
    %v10 = vld [vmem:[#allocation3] sm:$0x1]
    %11 = vrot.lane.b32.xlu0 %v10, 120
    %v12 = vpop.permute.xlu0 %11
    %vm13 = vcmask 64512
    %s14 = scalar_lea.vmem [#allocation2], 1
    %15 = vst.msk [vmem:[%s14] sm:$0x1] %vm13, %v12
    %s17 = sshllo.u32 0, 2
    %v19 = vld [vmem:[#allocation2] sm:%s17]
    %s20 = sshllo.u32 0, 2
    %21 = vst [vmem:[#allocation0] sm:%s20] %v19
    %s23 = ssub.s32 32, 32
    %24 = vsyncadd [#allocation1], %s23
    %s26 = sshll.u32 [#allocation0], 4
    %s27 = int_to_ptr.vmem [resolvable:$true] %s26
    %29 = dma.vmem_to_hbm [thread:$0]  %s27, 32, %s1, [#allocation1]
    %30 = dma.done [#allocation1], 32
    %31 = vsyncpa [#allocation1], 1

// kernel: chain_classifier_forward.1
$region0: #{chain_classifier_forward.1}
  #allocation0 [shape = 'u32[]', space=smem, size = 0x4, offset = 0x4, fixed_abs, tag = 'smem constant byte address 0x4 - core index']
  #allocation1 [shape = 'u32[144,128]{1,0:T(1,128)}', space=vmem, size = 0x12000, scoped, tag = 'internal scratch']
  %s0 = inlined_call_operand.vmem [shape: f32[16,40], index: 0, kind: input, shape index: {}]
  %s1 = inlined_call_operand.hbm [shape: f32[176,120], index: 1, kind: input, shape index: {}]
  %s2 = inlined_call_operand.vmem [shape: f32[16,5], index: 2, kind: output, shape index: {}]
  %s3 = sld [smem:[#allocation0]]
  $region22: #{chain_classifier_forward.1} parent=0
    _
  %s5 = ssub.s32 1, %s3
  %s6 = scalar_select 0, %s5, %s3
  $region1: #{chain_classifier_forward.1} parent=0
    #allocation2 [shape = 'u8[90112]{0}', space=vmem, size = 0x16000, scoped, tag = 'input window, operand 1, single buffered']
    #allocation3 [shape = 's32[1]{0}', space=sflag, size = 0x4, scoped, tag = 'scoped memory for chain_classifier_forward.1']
    %7 = vsyncpa [#allocation3], 0
    // Predicated region
    $region2: #{chain_classifier_forward.1} parent=1 // pred_check
      _
    $region3: #{chain_classifier_forward.1} parent=1 // pred_check_branch
      %9 = sbr.rel (0) target = $region5
    $region4: #{chain_classifier_forward.1} parent=1 // pred_region
      _
    $region5: #{chain_classifier_forward.1} parent=1 // pred_fallthru
      _
    // Predicated region
    $region6: #{chain_classifier_forward.1} parent=1 // pred_check
      _
    $region7: #{chain_classifier_forward.1} parent=1 // pred_check_branch
      %11 = sbr.rel (0) target = $region9
    $region8: #{chain_classifier_forward.1} parent=1 // pred_region
      %s13 = ssub.s32 2816, 2816
      %14 = vsyncadd [#allocation3], %s13
      %s15 = sshll.u32 [#allocation2], 4
      %s16 = int_to_ptr.vmem [resolvable:$true] %s15
      %21 = dma.hbm_to_vmem [thread:$0]  %s1, 2816, %s16, [#allocation3], 128, 128, 8
    $region9: #{chain_classifier_forward.1} parent=1 // pred_fallthru
      _
    // Predicated region
    $region10: #{chain_classifier_forward.1} parent=1 // pred_check
      _
    $region11: #{chain_classifier_forward.1} parent=1 // pred_check_branch
      %23 = sbr.rel (0) target = $region13
    $region12: #{chain_classifier_forward.1} parent=1 // pred_region
      %24 = dma.done [#allocation3], 2816
    $region13: #{chain_classifier_forward.1} parent=1 // pred_fallthru
      _
    %v25 = vld [vmem:[%s0] sm:$0xff]
    %v26 = vld [vmem:[%s0 + $0x8] sm:$0xff]
    %v27 = vld [vmem:[#allocation2] sm:$0xff]
    %v28 = vld [vmem:[#allocation2 + $0x8] sm:$0xff]
    %v29 = vld [vmem:[#allocation2 + $0x10] sm:$0xff]
    %v30 = vld [vmem:[#allocation2 + $0x18] sm:$0xff]
    %v31 = vld [vmem:[#allocation2 + $0x20] sm:$0xff]
    %v32 = vld [vmem:[#allocation2 + $0x28] sm:$0x1]
    %v33 = vld [vmem:[#allocation2 + $0x30] sm:$0xff]
    %v34 = vld [vmem:[#allocation2 + $0x38] sm:$0xff]
    %v35 = vld [vmem:[#allocation2 + $0x40] sm:$0xff]
    %v36 = vld [vmem:[#allocation2 + $0x48] sm:$0xff]
    %v37 = vld [vmem:[#allocation2 + $0x50] sm:$0xff]
    %v38 = vld [vmem:[#allocation2 + $0x58] sm:$0xff]
    %v39 = vld [vmem:[#allocation2 + $0x60] sm:$0xff]
    %v40 = vld [vmem:[#allocation2 + $0x68] sm:$0xff]
    %v41 = vld [vmem:[#allocation2 + $0x70] sm:$0xff]
    %v42 = vld [vmem:[#allocation2 + $0x78] sm:$0xff]
    %v43 = vld [vmem:[#allocation2 + $0x80] sm:$0xff]
    %v44 = vld [vmem:[#allocation2 + $0x88] sm:$0xff]
    %v45 = vld [vmem:[#allocation2 + $0x90] sm:$0xff]
    %v46 = vld [vmem:[#allocation2 + $0x98] sm:$0xff]
    %v47 = vld [vmem:[#allocation2 + $0xa0] sm:$0xff]
    %v48 = vld [vmem:[#allocation2 + $0xa8] sm:$0x1]
    %v49 = vlaneseq
    %v50 = vshrl.u32 %v49, 7
    %v51 = vsub.s32 0, %v50
    %v52 = vrot.slane %v32, %v51
    %vm53 = vcmask 326656
    %v55 = vsel %vm53, %v25, 0
    %v58 = vsel %vm53, %v26, 0
    %60 = vmatprep.subr.mxu0 0.0
    %61 = vmatpush1.msra.mxu0 %v27
    %62 = vmatprep.subr.mxu0 0.0
    %63 = vmatpush1.msra.mxu0 %v28
    %64 = vmatprep.subr.mxu0 0.0
    %65 = vmatpush1.msra.mxu0 %v29
    %66 = vmatprep.subr.mxu0 0.0
    %67 = vmatpush1.msra.mxu0 %v30
    %68 = vmatprep.subr.mxu0 0.0
    %69 = vmatpush1.msra.mxu0 %v31
    %70 = vmatprep.subr.mxu0 0.0
    %71 = vmatpush1.msra.mxu0 0.0
    %72 = vmatprep.subr.mxu0 0.0
    %73 = vmatpush1.msra.mxu0 0.0
    %74 = vmatprep.subr.mxu0 0.0
    %75 = vmatpush1.msra.mxu0 0.0
    %76 = vmatprep.subr.mxu0 0.0
    %77 = vmatpush1.msra.mxu0 0.0
    %78 = vmatprep.subr.mxu0 0.0
    %79 = vmatpush1.msra.mxu0 0.0
    %80 = vmatprep.subr.mxu0 0.0
    %81 = vmatpush1.msra.mxu0 0.0
    %82 = vmatprep.subr.mxu0 0.0
    %83 = vmatpush1.msra.mxu0 0.0
    %84 = vmatprep.subr.mxu0 0.0
    %85 = vmatpush1.msra.mxu0 0.0
    %86 = vmatprep.subr.mxu0 0.0
    %87 = vmatpush1.msra.mxu0 0.0
    %88 = vmatprep.subr.mxu0 0.0
    %89 = vmatpush1.msra.mxu0 0.0
    %90 = vmatprep.subr.mxu0 0.0
    %91 = vmatpush1.msra.mxu0 0.0
    %92 = vmatprep.subr.mxu0 0.0
    %93 = vmatpush1.msra.mxu0 0.0
    %94 = vmatprep.subr.mxu0 0.0
    %95 = vmatpush1.msra.mxu0 0.0
    %96 = vmatprep.subr.mxu0 0.0
    %97 = vmatpush1.msra.mxu0 0.0
    %98 = vmatprep.subr.mxu0 0.0
    %99 = vmatpush1.msra.mxu0 0.0
    %100 = vmatprep.subr.mxu0 0.0
    %101 = vmatpush1.msra.mxu0 0.0
    %102 = vmatprep.subr.mxu0 0.0
    %103 = vmatpush1.msra.mxu0 0.0
    %104 = vmatprep.subr.mxu0 0.0
    %105 = vmatpush1.msra.mxu0 0.0
    %106 = vmatprep.subr.mxu0 0.0
    %107 = vmatpush1.msra.mxu0 0.0
    %108 = vmatprep.subr.mxu0 0.0
    %109 = vmatpush1.msra.mxu0 0.0
    %110 = vmatprep.subr.mxu0 0.0
    %111 = vmatpush1.msra.mxu0 0.0
    %112 = vmatprep.subr.mxu0 0.0
    %113 = vmatpush1.msra.mxu0 0.0
    %114 = vmatprep.subr.mxu0 0.0
    %115 = vmatpush1.msra.mxu0 0.0
    %116 = vmatprep.subr.mxu0 0.0
    %117 = vmatpush1.msra.mxu0 0.0
    %118 = vmatprep.subr.mxu0 0.0
    %119 = vmatpush1.msra.mxu0 0.0
    %120 = vmatprep.subr.mxu0 0.0
    %121 = vmatpush1.msra.mxu0 0.0
    %122 = vmatprep.subr.mxu0 0.0
    %123 = vmatpush1.msra.mxu0 0.0
    %124 = vmatprep.mubr.f32.mxu0 0.0
    %125 = vmatmul.mubr.f32.gmra.mrb[0].mxu0 %v55
    %v126 = vpop.f32.mrb[0].mxu0
    %v127 = vadd.f32 %v52, %v126
    %v128 = vpop.f32.mrb[0].mxu0
    %129 = vmatprep.mubr.f32.mxu0 0.0
    %130 = vmatmul.mubr.f32.gmra.mrb[0].mxu0 %v58
    %v131 = vpop.f32.mrb[0].mxu0
    %v132 = vadd.f32 %v52, %v131
    %v133 = vpop.f32.mrb[0].mxu0
    %134 = vdwg.mxu0
    %v135 = vmax.f32 %v127, 0.0
    %v136 = vmax.f32 %v132, 0.0
    %v137 = vlaneseq
    %v138 = vshrl.u32 %v137, 7
    %v139 = vsub.s32 0, %v138
    %v140 = vrot.slane %v48, %v139
    %vm141 = vcmask 982016
    %v143 = vsel %vm141, %v135, 0
    %v146 = vsel %vm141, %v136, 0
    %148 = vmatprep.subr.mxu0 0.0
    %149 = vmatpush1.msra.mxu0 %v33
    %150 = vmatprep.subr.mxu0 0.0
    %151 = vmatpush1.msra.mxu0 %v34
    %152 = vmatprep.subr.mxu0 0.0
    %153 = vmatpush1.msra.mxu0 %v35
    %154 = vmatprep.subr.mxu0 0.0
    %155 = vmatpush1.msra.mxu0 %v36
    %156 = vmatprep.subr.mxu0 0.0
    %157 = vmatpush1.msra.mxu0 %v37
    %158 = vmatprep.subr.mxu0 0.0
    %159 = vmatpush1.msra.mxu0 %v38
    %160 = vmatprep.subr.mxu0 0.0
    %161 = vmatpush1.msra.mxu0 %v39
    %162 = vmatprep.subr.mxu0 0.0
    %163 = vmatpush1.msra.mxu0 %v40
    %164 = vmatprep.subr.mxu0 0.0
    %165 = vmatpush1.msra.mxu0 %v41
    %166 = vmatprep.subr.mxu0 0.0
    %167 = vmatpush1.msra.mxu0 %v42
    %168 = vmatprep.subr.mxu0 0.0
    %169 = vmatpush1.msra.mxu0 %v43
    %170 = vmatprep.subr.mxu0 0.0
    %171 = vmatpush1.msra.mxu0 %v44
    %172 = vmatprep.subr.mxu0 0.0
    %173 = vmatpush1.msra.mxu0 %v45
    %174 = vmatprep.subr.mxu0 0.0
    %175 = vmatpush1.msra.mxu0 %v46
    %176 = vmatprep.subr.mxu0 0.0
    %177 = vmatpush1.msra.mxu0 %v47
    %178 = vmatprep.subr.mxu0 0.0
    %179 = vmatpush1.msra.mxu0 0.0
    %180 = vmatprep.subr.mxu0 0.0
    %181 = vmatpush1.msra.mxu0 0.0
    %182 = vmatprep.subr.mxu0 0.0
    %183 = vmatpush1.msra.mxu0 0.0
    %184 = vmatprep.subr.mxu0 0.0
    %185 = vmatpush1.msra.mxu0 0.0
    %186 = vmatprep.subr.mxu0 0.0
    %187 = vmatpush1.msra.mxu0 0.0
    %188 = vmatprep.subr.mxu0 0.0
    %189 = vmatpush1.msra.mxu0 0.0
    %190 = vmatprep.subr.mxu0 0.0
    %191 = vmatpush1.msra.mxu0 0.0
    %192 = vmatprep.subr.mxu0 0.0
    %193 = vmatpush1.msra.mxu0 0.0
    %194 = vmatprep.subr.mxu0 0.0
    %195 = vmatpush1.msra.mxu0 0.0
    %196 = vmatprep.subr.mxu0 0.0
    %197 = vmatpush1.msra.mxu0 0.0
    %198 = vmatprep.subr.mxu0 0.0
    %199 = vmatpush1.msra.mxu0 0.0
    %200 = vmatprep.subr.mxu0 0.0
    %201 = vmatpush1.msra.mxu0 0.0
    %202 = vmatprep.subr.mxu0 0.0
    %203 = vmatpush1.msra.mxu0 0.0
    %204 = vmatprep.subr.mxu0 0.0
    %205 = vmatpush1.msra.mxu0 0.0
    %206 = vmatprep.subr.mxu0 0.0
    %207 = vmatpush1.msra.mxu0 0.0
    %208 = vmatprep.subr.mxu0 0.0
    %209 = vmatpush1.msra.mxu0 0.0
    %210 = vmatprep.subr.mxu0 0.0
    %211 = vmatpush1.msra.mxu0 0.0
    %212 = vmatprep.mubr.f32.mxu0 0.0
    %213 = vmatmul.mubr.f32.gmra.mrb[0].mxu0 %v143
    %v214 = vpop.f32.mrb[0].mxu0
    %v215 = vadd.f32 %v140, %v214
    %v216 = vpop.f32.mrb[0].mxu0
    %217 = vmatprep.mubr.f32.mxu0 0.0
    %218 = vmatmul.mubr.f32.gmra.mrb[0].mxu0 %v146
    %v219 = vpop.f32.mrb[0].mxu0
    %v220 = vadd.f32 %v140, %v219
    %v221 = vpop.f32.mrb[0].mxu0
    %222 = vdwg.mxu0
    %v223 = vxor.u32 %v215, 2147483648
    %v224 = vxor.u32 %v220, 2147483648
    %v225 = vmul.f32 %v223, 1.442695
    %v226 = vpow.pop %v225
    %v227 = vmul.f32 %v224, 1.442695
    %v228 = vpow.pop %v227
    %v229 = vadd.f32 %v226, 1.0
    %v230 = vadd.f32 %v228, 1.0
    %v231 = vrcp.pop %v229
    %v232 = vmul.f32 1.0, %v231
    %v233 = vrcp.pop %v230
    %v234 = vmul.f32 1.0, %v233
    %237 = vrot.lane.b32.xlu0 %v232, 32
    %v238 = vpop.permute.xlu0 %237
    %239 = vrot.lane.b32.xlu0 %v234, 32
    %v240 = vpop.permute.xlu0 %239
    %vm243 = vcmp.lt.f32.partialorder %v25, %v238
    %vm244 = vcmp.lt.f32.partialorder %v26, %v240
    %v245 = vsel %vm243, 1, 0
    %v246 = vsel %vm244, 1, 0
    %v247 = vcvt.s32.f32 %v245
    %v248 = vcvt.s32.f32 %v246
    %v249 = vsub.f32 1.0, %v232
    %v250 = vsub.f32 1.0, %v234
    %253 = vrot.lane.b32.xlu0 %v249, 32
    %v254 = vpop.permute.xlu0 %253
    %255 = vrot.lane.b32.xlu0 %v250, 32
    %v256 = vpop.permute.xlu0 %255
    %v259 = vsel %vm243, %v238, %v254
    %v260 = vsel %vm244, %v240, %v256
    %v261 = vadd.f32 %v259, 0.0
    %v262 = vadd.f32 %v260, 0.0
    %263 = vrot.lane.b32.xlu0 %v232, 30
    %v264 = vpop.permute.xlu0 %263
    %265 = vrot.lane.b32.xlu0 %v234, 30
    %v266 = vpop.permute.xlu0 %265
    %269 = vrot.lane.b32.xlu0 %v232, 31
    %v270 = vpop.permute.xlu0 %269
    %271 = vrot.lane.b32.xlu0 %v234, 31
    %v272 = vpop.permute.xlu0 %271
    %v275 = vsel %vm243, %v264, %v270
    %v276 = vsel %vm244, %v266, %v272
    %279 = vrot.lane.b32.xlu0 %v275, 1
    %v280 = vpop.permute.xlu0 %279
    %281 = vrot.lane.b32.xlu0 %v276, 1
    %v282 = vpop.permute.xlu0 %281
    %vm285 = vcmp.lt.f32.partialorder %v25, %v280
    %vm286 = vcmp.lt.f32.partialorder %v26, %v282
    %v287 = vsel %vm285, 1, 0
    %v288 = vsel %vm286, 1, 0
    %v289 = vcvt.s32.f32 %v287
    %v290 = vcvt.s32.f32 %v288
    %v291 = vsub.f32 1.0, %v275
    %v292 = vsub.f32 1.0, %v276
    %295 = vrot.lane.b32.xlu0 %v291, 1
    %v296 = vpop.permute.xlu0 %295
    %297 = vrot.lane.b32.xlu0 %v292, 1
    %v298 = vpop.permute.xlu0 %297
    %v301 = vsel %vm285, %v280, %v296
    %v302 = vsel %vm286, %v282, %v298
    %305 = vrot.lane.b32.xlu0 %v301, 127
    %v306 = vpop.permute.xlu0 %305
    %307 = vrot.lane.b32.xlu0 %v302, 127
    %v308 = vpop.permute.xlu0 %307
    %v311 = vadd.f32 %v261, %v306
    %v312 = vadd.f32 %v262, %v308
    %313 = vrot.lane.b32.xlu0 %v232, 29
    %v314 = vpop.permute.xlu0 %313
    %315 = vrot.lane.b32.xlu0 %v234, 29
    %v316 = vpop.permute.xlu0 %315
    %v319 = vsel %vm285, %v314, %v264
    %v320 = vsel %vm286, %v316, %v266
    %321 = vrot.lane.b32.xlu0 %v232, 27
    %v322 = vpop.permute.xlu0 %321
    %323 = vrot.lane.b32.xlu0 %v234, 27
    %v324 = vpop.permute.xlu0 %323
    %327 = vrot.lane.b32.xlu0 %v232, 28
    %v328 = vpop.permute.xlu0 %327
    %329 = vrot.lane.b32.xlu0 %v234, 28
    %v330 = vpop.permute.xlu0 %329
    %v333 = vsel %vm285, %v322, %v328
    %v334 = vsel %vm286, %v324, %v330
    %337 = vrot.lane.b32.xlu0 %v333, 127
    %v338 = vpop.permute.xlu0 %337
    %339 = vrot.lane.b32.xlu0 %v334, 127
    %v340 = vpop.permute.xlu0 %339
    %345 = vrot.lane.b32.xlu0 %v319, 127
    %v346 = vpop.permute.xlu0 %345
    %347 = vrot.lane.b32.xlu0 %v320, 127
    %v348 = vpop.permute.xlu0 %347
    %v351 = vsel %vm243, %v338, %v346
    %v352 = vsel %vm244, %v340, %v348
    %355 = vrot.lane.b32.xlu0 %v351, 2
    %v356 = vpop.permute.xlu0 %355
    %357 = vrot.lane.b32.xlu0 %v352, 2
    %v358 = vpop.permute.xlu0 %357
    %vm361 = vcmp.lt.f32.partialorder %v25, %v356
    %vm362 = vcmp.lt.f32.partialorder %v26, %v358
    %v363 = vsel %vm361, 1, 0
    %v364 = vsel %vm362, 1, 0
    %v365 = vcvt.s32.f32 %v363
    %v366 = vcvt.s32.f32 %v364
    %v367 = vsub.f32 1.0, %v351
    %v368 = vsub.f32 1.0, %v352
    %371 = vrot.lane.b32.xlu0 %v367, 2
    %v372 = vpop.permute.xlu0 %371
    %373 = vrot.lane.b32.xlu0 %v368, 2
    %v374 = vpop.permute.xlu0 %373
    %v377 = vsel %vm361, %v356, %v372
    %v378 = vsel %vm362, %v358, %v374
    %381 = vrot.lane.b32.xlu0 %v377, 126
    %v382 = vpop.permute.xlu0 %381
    %383 = vrot.lane.b32.xlu0 %v378, 126
    %v384 = vpop.permute.xlu0 %383
    %v387 = vadd.f32 %v311, %v382
    %v388 = vadd.f32 %v312, %v384
    %389 = vrot.lane.b32.xlu0 %v232, 26
    %v390 = vpop.permute.xlu0 %389
    %391 = vrot.lane.b32.xlu0 %v234, 26
    %v392 = vpop.permute.xlu0 %391
    %v395 = vsel %vm361, %v390, %v322
    %v396 = vsel %vm362, %v392, %v324
    %397 = vrot.lane.b32.xlu0 %v232, 24
    %v398 = vpop.permute.xlu0 %397
    %399 = vrot.lane.b32.xlu0 %v234, 24
    %v400 = vpop.permute.xlu0 %399
    %403 = vrot.lane.b32.xlu0 %v232, 25
    %v404 = vpop.permute.xlu0 %403
    %405 = vrot.lane.b32.xlu0 %v234, 25
    %v406 = vpop.permute.xlu0 %405
    %v409 = vsel %vm361, %v398, %v404
    %v410 = vsel %vm362, %v400, %v406
    %411 = vrot.lane.b32.xlu0 %v232, 22
    %v412 = vpop.permute.xlu0 %411
    %413 = vrot.lane.b32.xlu0 %v234, 22
    %v414 = vpop.permute.xlu0 %413
    %417 = vrot.lane.b32.xlu0 %v232, 23
    %v418 = vpop.permute.xlu0 %417
    %419 = vrot.lane.b32.xlu0 %v234, 23
    %v420 = vpop.permute.xlu0 %419
    %v423 = vsel %vm361, %v412, %v418
    %v424 = vsel %vm362, %v414, %v420
    %425 = vrot.lane.b32.xlu0 %v232, 20
    %v426 = vpop.permute.xlu0 %425
    %427 = vrot.lane.b32.xlu0 %v234, 20
    %v428 = vpop.permute.xlu0 %427
    %431 = vrot.lane.b32.xlu0 %v232, 21
    %v432 = vpop.permute.xlu0 %431
    %433 = vrot.lane.b32.xlu0 %v234, 21
    %v434 = vpop.permute.xlu0 %433
    %v437 = vsel %vm361, %v426, %v432
    %v438 = vsel %vm362, %v428, %v434
    %441 = vrot.lane.b32.xlu0 %v409, 127
    %v442 = vpop.permute.xlu0 %441
    %443 = vrot.lane.b32.xlu0 %v410, 127
    %v444 = vpop.permute.xlu0 %443
    %449 = vrot.lane.b32.xlu0 %v395, 127
    %v450 = vpop.permute.xlu0 %449
    %451 = vrot.lane.b32.xlu0 %v396, 127
    %v452 = vpop.permute.xlu0 %451
    %v455 = vsel %vm285, %v442, %v450
    %v456 = vsel %vm286, %v444, %v452
    %459 = vrot.lane.b32.xlu0 %v437, 127
    %v460 = vpop.permute.xlu0 %459
    %461 = vrot.lane.b32.xlu0 %v438, 127
    %v462 = vpop.permute.xlu0 %461
    %467 = vrot.lane.b32.xlu0 %v423, 127
    %v468 = vpop.permute.xlu0 %467
    %469 = vrot.lane.b32.xlu0 %v424, 127
    %v470 = vpop.permute.xlu0 %469
    %v473 = vsel %vm285, %v460, %v468
    %v474 = vsel %vm286, %v462, %v470
    %477 = vrot.lane.b32.xlu0 %v473, 127
    %v478 = vpop.permute.xlu0 %477
    %479 = vrot.lane.b32.xlu0 %v474, 127
    %v480 = vpop.permute.xlu0 %479
    %485 = vrot.lane.b32.xlu0 %v455, 127
    %v486 = vpop.permute.xlu0 %485
    %487 = vrot.lane.b32.xlu0 %v456, 127
    %v488 = vpop.permute.xlu0 %487
    %v491 = vsel %vm243, %v478, %v486
    %v492 = vsel %vm244, %v480, %v488
    %495 = vrot.lane.b32.xlu0 %v491, 3
    %v496 = vpop.permute.xlu0 %495
    %497 = vrot.lane.b32.xlu0 %v492, 3
    %v498 = vpop.permute.xlu0 %497
    %vm501 = vcmp.lt.f32.partialorder %v25, %v496
    %vm502 = vcmp.lt.f32.partialorder %v26, %v498
    %v503 = vsel %vm501, 1, 0
    %v504 = vsel %vm502, 1, 0
    %v505 = vcvt.s32.f32 %v503
    %v506 = vcvt.s32.f32 %v504
    %v507 = vsub.f32 1.0, %v491
    %v508 = vsub.f32 1.0, %v492
    %511 = vrot.lane.b32.xlu0 %v507, 3
    %v512 = vpop.permute.xlu0 %511
    %513 = vrot.lane.b32.xlu0 %v508, 3
    %v514 = vpop.permute.xlu0 %513
    %v517 = vsel %vm501, %v496, %v512
    %v518 = vsel %vm502, %v498, %v514
    %521 = vrot.lane.b32.xlu0 %v517, 125
    %v522 = vpop.permute.xlu0 %521
    %523 = vrot.lane.b32.xlu0 %v518, 125
    %v524 = vpop.permute.xlu0 %523
    %v527 = vadd.f32 %v387, %v522
    %v528 = vadd.f32 %v388, %v524
    %531 = vrot.lane.b32.xlu0 %v247, 96
    %v532 = vpop.permute.xlu0 %531
    %533 = vrot.lane.b32.xlu0 %v248, 96
    %v534 = vpop.permute.xlu0 %533
    %539 = vrot.lane.b32.xlu0 %v289, 96
    %v540 = vpop.permute.xlu0 %539
    %541 = vrot.lane.b32.xlu0 %v290, 96
    %v542 = vpop.permute.xlu0 %541
    %547 = vrot.lane.b32.xlu0 %v365, 96
    %v548 = vpop.permute.xlu0 %547
    %549 = vrot.lane.b32.xlu0 %v366, 96
    %v550 = vpop.permute.xlu0 %549
    %555 = vrot.lane.b32.xlu0 %v505, 96
    %v556 = vpop.permute.xlu0 %555
    %557 = vrot.lane.b32.xlu0 %v506, 96
    %v558 = vpop.permute.xlu0 %557
    %563 = vrot.lane.b32.xlu0 %v527, 100
    %v564 = vpop.permute.xlu0 %563
    %565 = vrot.lane.b32.xlu0 %v528, 100
    %v566 = vpop.permute.xlu0 %565
    %vm569 = vcmask 7168
    %v570 = vsel %vm569, %v532, %v540
    %v571 = vsel %vm569, %v534, %v542
    %vm572 = vcmask 15360
    %v573 = vsel %vm572, %v570, %v548
    %v574 = vsel %vm572, %v571, %v550
    %vm575 = vcmask 23552
    %v576 = vsel %vm575, %v573, %v556
    %v577 = vsel %vm575, %v574, %v558
    %vm578 = vcmask 31744
    %v579 = vsel %vm578, %v576, %v564
    %v580 = vsel %vm578, %v577, %v566
    %vm581 = vcmask 39936
    %582 = vst.msk [vmem:[%s2] sm:$0xff] %vm581, %v579
    %583 = vst.msk [vmem:[%s2 + $0x8] sm:$0xff] %vm581, %v580
    // Predicated region
    $region14: #{chain_classifier_forward.1} parent=1 // pred_check
      _
    $region15: #{chain_classifier_forward.1} parent=1 // pred_check_branch
      %585 = sbr.rel (0) target = $region17
    $region16: #{chain_classifier_forward.1} parent=1 // pred_region
      _
    $region17: #{chain_classifier_forward.1} parent=1 // pred_fallthru
      _
    // Predicated region
    $region18: #{chain_classifier_forward.1} parent=1 // pred_check
      _
    $region19: #{chain_classifier_forward.1} parent=1 // pred_check_branch
      %587 = sbr.rel (0) target = $region21
    $region20: #{chain_classifier_forward.1} parent=1 // pred_region
      _
    $region21: #{chain_classifier_forward.1} parent=1 // pred_fallthru
      _
    %588 = vsyncpa [#allocation3], 1

</llo_original>
